<compile_context>
chip_gen: v7x
topology: tpu7x:2x2x1
jax: 0.10.0
libtpu: 0.0.40
codegen_flags: <defaults>
</compile_context>

<pallas_src>
import jax
import jax.numpy as jnp
from jax.experimental import pallas as pl
from jax.experimental.pallas import tpu as pltpu


def _sq_grad_kernel(p_ref, g_ref, out_ref):
    # (B, H, W) block; cast to f32 inside the kernel (inputs stay native dtype
    # in HBM -> half the DMA bytes for bf16 inputs).
    p = p_ref[...].astype(jnp.float32)
    g = g_ref[...].astype(jnp.float32)
    d = p - g                                  # linearity: dx(p)-dx(g) = dx(d)
    B, H, W = d.shape

    # Cheap edge masks: factored (1,1,W) / (1,H,1) iotas, broadcast in where().
    col = jax.lax.broadcasted_iota(jnp.int32, (1, 1, W), 2)
    row = jax.lax.broadcasted_iota(jnp.int32, (1, H, 1), 1)

    # dx: right neighbor d[:, :, j+1] (zero at j == W-1) minus left neighbor.
    xr = jnp.where(col < W - 1, pltpu.roll(d, shift=W - 1, axis=2), 0.0)
    xl = jnp.where(col > 0, pltpu.roll(d, shift=1, axis=2), 0.0)
    # dy: below neighbor d[:, i+1, :] (zero at i == H-1) minus above neighbor.
    xd = jnp.where(row < H - 1, pltpu.roll(d, shift=H - 1, axis=1), 0.0)
    xu = jnp.where(row > 0, pltpu.roll(d, shift=1, axis=1), 0.0)

    err = 0.5 * (jnp.abs(xr - xl) + jnp.abs(xd - xu))

    # Per-block partial: reduce batch (VPU adds) and sublanes (one XLU reduce),
    # keep the lane axis for a dense row store. Final cross-lane reduce + /1e4
    # happens in the wrapper, so the grid stays fully parallel (megacore on v7x).
    out_ref[...] = err.sum(axis=0, keepdims=True).sum(axis=1, keepdims=True)


def squared_gradient_loss(pred, gt):
    """pred, gt: (N, C, H, W) arrays -> scalar f32 loss (matches PyTorch module)."""
    N, C, H, W = pred.shape
    NC = N * C
    p = pred.reshape(NC, H, W)   # keep native dtype; kernel casts to f32
    g = gt.reshape(NC, H, W)

    # Block sizing: 2 inputs x 2 pipeline buffers x (B*H*W*itemsize) plus f32
    # intermediates. Target ~4 MiB per input block -> <= ~16 MiB pipelined,
    # safe under the default scoped VMEM on v5e/v6e/v7x (raised below anyway).
    itemsize = jnp.dtype(pred.dtype).itemsize
    plane_bytes = max(H * W * itemsize, 1)
    B = max(1, min(NC, (4 << 20) // plane_bytes))
    num_blocks = pl.cdiv(NC, B)
    pad = num_blocks * B - NC
    if pad:
        # Zero-padded planes contribute exactly 0 to the loss (d == 0 there).
        p = jnp.pad(p, ((0, pad), (0, 0), (0, 0)))
        g = jnp.pad(g, ((0, pad), (0, 0), (0, 0)))

    partials = pl.pallas_call(
        _sq_grad_kernel,
        out_shape=jax.ShapeDtypeStruct((num_blocks, 1, W), jnp.float32),
        grid_spec=pltpu.PrefetchScalarGridSpec(
            num_scalar_prefetch=0,
            grid=(num_blocks,),
            in_specs=[
                pl.BlockSpec((B, H, W), lambda i: (i, 0, 0)),
                pl.BlockSpec((B, H, W), lambda i: (i, 0, 0)),
            ],
            out_specs=pl.BlockSpec((1, 1, W), lambda i: (i, 0, 0)),
        ),
        compiler_params=pltpu.CompilerParams(
            dimension_semantics=("parallel",),   # independent blocks -> both TCs on v7x
            vmem_limit_bytes=48 << 20,           # fits v7x's 64 MiB physical VMEM
        ),
    )(p, g)

    # TODO(synk): for real workloads keep W >= 128 so the lane axis is dense.
    return (jnp.sum(partials) / 10000.0).astype(jnp.float32)


def _reference_loss(pred, gt):
    """Pure-JAX reference matching the PyTorch forward exactly."""
    def dx(x):
        xp = jnp.pad(x, ((0, 0), (0, 0), (0, 0), (1, 1)))
        return 0.5 * (xp[..., 2:] - xp[..., :-2])

    def dy(x):
        xp = jnp.pad(x, ((0, 0), (0, 0), (1, 1), (0, 0)))
        return 0.5 * (xp[..., 2:, :] - xp[..., :-2, :])

    pred = pred.astype(jnp.float32)
    gt = gt.astype(jnp.float32)
    err = (jnp.abs(dx(pred) - dx(gt)).sum(1, keepdims=True)
           + jnp.abs(dy(pred) - dy(gt)).sum(1, keepdims=True)) / 10000.0
    return err.sum().astype(jnp.float32)


if __name__ == "__main__":
    key = jax.random.PRNGKey(0)
    k1, k2 = jax.random.split(key)
    # C = 1: the PyTorch module uses groups=C with a (1,1,3,3) filter, which is
    # only valid for single-channel inputs (e.g. depth maps).
    N, C, H, W = 4, 1, 16, 16
    pred = jax.random.normal(k1, (N, C, H, W), dtype=jnp.float32)
    gt = jax.random.normal(k2, (N, C, H, W), dtype=jnp.float32)

    loss = jax.block_until_ready(squared_gradient_loss(pred, gt))
    ref = jax.block_until_ready(_reference_loss(pred, gt))

    assert jnp.allclose(loss, ref, rtol=1e-5, atol=1e-6), (loss, ref)
    print("KERNEL_OK")
</pallas_src>

<mosaic_0001>
module attributes {stable_mosaic.version = 11 : i64} {
  func.func @_sq_grad_kernel(%arg0: i32, %arg1: memref<4x16x16xf32, #tpu.memory_space<vmem>>, %arg2: memref<4x16x16xf32, #tpu.memory_space<vmem>>, %arg3: memref<1x1x16xf32, #tpu.memory_space<vmem>>) attributes {dimension_semantics = [#tpu.dimension_semantics<parallel>], iteration_bounds = array<i64: 1>, scalar_prefetch = 0 : i64, scratch_operands = 0 : i64, tpu.core_type = #tpu.core_type<tc>, window_params = [{transform_indices = @transform_0, window_bounds = array<i64: 4, 16, 16>}, {transform_indices = @transform_1, window_bounds = array<i64: 4, 16, 16>}, {transform_indices = @transform_2, window_bounds = array<i64: 1, 1, 16>}]} {
    %c0 = arith.constant 0 : index
    %c0_0 = arith.constant 0 : index
    %c0_1 = arith.constant 0 : index
    %0 = vector.load %arg1[%c0, %c0_0, %c0_1] : memref<4x16x16xf32, #tpu.memory_space<vmem>>, vector<4x16x16xf32>
    %c0_2 = arith.constant 0 : index
    %c0_3 = arith.constant 0 : index
    %c0_4 = arith.constant 0 : index
    %1 = vector.load %arg2[%c0_2, %c0_3, %c0_4] : memref<4x16x16xf32, #tpu.memory_space<vmem>>, vector<4x16x16xf32>
    %2 = arith.subf %0, %1 : vector<4x16x16xf32>
    %3 = tpu.iota {dimensions = array<i32: 2>} : vector<1x1x16xi32>
    %4 = tpu.iota {dimensions = array<i32: 1>} : vector<1x16x1xi32>
    %c15_i32 = arith.constant 15 : i32
    %5 = vector.broadcast %c15_i32 : i32 to vector<1x1x16xi32>
    %6 = arith.cmpi slt, %3, %5 : vector<1x1x16xi32>
    %c15_i32_5 = arith.constant 15 : i32
    %7 = tpu.dynamic_rotate %2 by %c15_i32_5 dim 2 : vector<4x16x16xf32>, i32 -> vector<4x16x16xf32>
    %cst = arith.constant 0.000000e+00 : f32
    %8 = vector.shape_cast %6 : vector<1x1x16xi1> to vector<1x1x16xi1>
    %9 = vector.broadcast %8 : vector<1x1x16xi1> to vector<4x16x16xi1>
    %10 = vector.broadcast %cst : f32 to vector<4x16x16xf32>
    %11 = arith.select %9, %7, %10 : vector<4x16x16xi1>, vector<4x16x16xf32>
    %c0_i32 = arith.constant 0 : i32
    %12 = vector.broadcast %c0_i32 : i32 to vector<1x1x16xi32>
    %13 = arith.cmpi sgt, %3, %12 : vector<1x1x16xi32>
    %c1_i32 = arith.constant 1 : i32
    %14 = tpu.dynamic_rotate %2 by %c1_i32 dim 2 : vector<4x16x16xf32>, i32 -> vector<4x16x16xf32>
    %cst_6 = arith.constant 0.000000e+00 : f32
    %15 = vector.shape_cast %13 : vector<1x1x16xi1> to vector<1x1x16xi1>
    %16 = vector.broadcast %15 : vector<1x1x16xi1> to vector<4x16x16xi1>
    %17 = vector.broadcast %cst_6 : f32 to vector<4x16x16xf32>
    %18 = arith.select %16, %14, %17 : vector<4x16x16xi1>, vector<4x16x16xf32>
    %c15_i32_7 = arith.constant 15 : i32
    %19 = vector.broadcast %c15_i32_7 : i32 to vector<1x16x1xi32>
    %20 = arith.cmpi slt, %4, %19 : vector<1x16x1xi32>
    %c15_i32_8 = arith.constant 15 : i32
    %21 = tpu.dynamic_rotate %2 by %c15_i32_8 dim 1 : vector<4x16x16xf32>, i32 -> vector<4x16x16xf32>
    %cst_9 = arith.constant 0.000000e+00 : f32
    %22 = vector.shape_cast %20 : vector<1x16x1xi1> to vector<1x16x1xi1>
    %23 = vector.broadcast %22 : vector<1x16x1xi1> to vector<4x16x16xi1>
    %24 = vector.broadcast %cst_9 : f32 to vector<4x16x16xf32>
    %25 = arith.select %23, %21, %24 : vector<4x16x16xi1>, vector<4x16x16xf32>
    %c0_i32_10 = arith.constant 0 : i32
    %26 = vector.broadcast %c0_i32_10 : i32 to vector<1x16x1xi32>
    %27 = arith.cmpi sgt, %4, %26 : vector<1x16x1xi32>
    %c1_i32_11 = arith.constant 1 : i32
    %28 = tpu.dynamic_rotate %2 by %c1_i32_11 dim 1 : vector<4x16x16xf32>, i32 -> vector<4x16x16xf32>
    %cst_12 = arith.constant 0.000000e+00 : f32
    %29 = vector.shape_cast %27 : vector<1x16x1xi1> to vector<1x16x1xi1>
    %30 = vector.broadcast %29 : vector<1x16x1xi1> to vector<4x16x16xi1>
    %31 = vector.broadcast %cst_12 : f32 to vector<4x16x16xf32>
    %32 = arith.select %30, %28, %31 : vector<4x16x16xi1>, vector<4x16x16xf32>
    %33 = arith.subf %11, %18 : vector<4x16x16xf32>
    %34 = math.absf %33 : vector<4x16x16xf32>
    %35 = arith.subf %25, %32 : vector<4x16x16xf32>
    %36 = math.absf %35 : vector<4x16x16xf32>
    %37 = arith.addf %34, %36 : vector<4x16x16xf32>
    %cst_13 = arith.constant 5.000000e-01 : f32
    %38 = vector.broadcast %cst_13 : f32 to vector<4x16x16xf32>
    %39 = arith.mulf %38, %37 : vector<4x16x16xf32>
    %cst_14 = arith.constant dense<0.000000e+00> : vector<16x16xf32>
    %40 = vector.multi_reduction <add>, %39, %cst_14 [0] : vector<4x16x16xf32> to vector<16x16xf32>
    %41 = vector.shape_cast %40 : vector<16x16xf32> to vector<1x16x16xf32>
    %cst_15 = arith.constant dense<0.000000e+00> : vector<1x16xf32>
    %42 = vector.multi_reduction <add>, %41, %cst_15 [1] : vector<1x16x16xf32> to vector<1x16xf32>
    %43 = vector.shape_cast %42 : vector<1x16xf32> to vector<1x1x16xf32>
    %c0_16 = arith.constant 0 : index
    %c0_17 = arith.constant 0 : index
    %c0_18 = arith.constant 0 : index
    %44 = vector.load %arg3[%c0_16, %c0_17, %c0_18] : memref<1x1x16xf32, #tpu.memory_space<vmem>>, vector<1x1x16xf32>
    tpu.vector_store %arg3[%c0_16, %c0_17, %c0_18], %43 {strides = array<i32>} : memref<1x1x16xf32, #tpu.memory_space<vmem>>, vector<1x1x16xf32>,
    return
  }
  func.func @transform_0(%arg0: i32) -> (i32, i32, i32) {
    %c0_i32 = arith.constant 0 : i32
    %c0_i32_0 = arith.constant 0 : i32
    %c0_i32_1 = arith.constant 0 : i32
    return %arg0, %c0_i32, %c0_i32_0 : i32, i32, i32
  }
  func.func @transform_1(%arg0: i32) -> (i32, i32, i32) {
    %c0_i32 = arith.constant 0 : i32
    %c0_i32_0 = arith.constant 0 : i32
    %c0_i32_1 = arith.constant 0 : i32
    return %arg0, %c0_i32, %c0_i32_0 : i32, i32, i32
  }
  func.func @transform_2(%arg0: i32) -> (i32, i32, i32) {
    %c0_i32 = arith.constant 0 : i32
    %c0_i32_0 = arith.constant 0 : i32
    %c0_i32_1 = arith.constant 0 : i32
    return %arg0, %c0_i32, %c0_i32_0 : i32, i32, i32
  }
}

</mosaic_0001>

<llo_original>
// kernel: tpu_custom_call.1
$region0: #{tpu_custom_call.1}
  #allocation0 [shape = 'u32[]', space=smem, size = 0x4, offset = 0x4, fixed_abs, tag = 'smem constant byte address 0x4 - core index']
  #allocation1 [shape = 'u32[144,128]{1,0:T(1,128)}', space=vmem, size = 0x12000, scoped, tag = 'internal scratch']
  %s0 = inlined_call_operand.hbm [shape: f32[4,16,16], index: 0, kind: input, shape index: {}]
  %s1 = inlined_call_operand.hbm [shape: f32[4,16,16], index: 1, kind: input, shape index: {}]
  %s2 = inlined_call_operand.hbm [shape: f32[1,1,16], index: 2, kind: output, shape index: {}]
  %s3 = sld [smem:[#allocation0]]
  $region26: #{tpu_custom_call.1} parent=0
    _
  %s5 = ssub.s32 1, %s3
  %s6 = scalar_select 0, %s5, %s3
  $region1: #{tpu_custom_call.1} parent=0
    #allocation2 [shape = 'u8[32768]{0}', space=vmem, size = 0x8000, scoped, tag = 'input window, operand 0, single buffered']
    #allocation3 [shape = 's32[1]{0}', space=sflag, size = 0x4, scoped, tag = 'scoped memory for tpu_custom_call.1']
    #allocation4 [shape = 's32[1]{0}', space=sflag, size = 0x4, scoped, tag = 'scoped memory for tpu_custom_call.1']
    #allocation5 [shape = 'u8[32768]{0}', space=vmem, size = 0x8000, scoped, tag = 'input window, operand 1, single buffered']
    #allocation6 [shape = 's32[1]{0}', space=sflag, size = 0x4, scoped, tag = 'scoped memory for tpu_custom_call.1']
    #allocation7 [shape = 'u8[512]{0}', space=vmem, size = 0x400, scoped, tag = 'output window, operand 0, single buffered']
    %7 = vsyncpa [#allocation3], 0
    %8 = vsyncpa [#allocation6], 0
    %9 = vsyncpa [#allocation4], 0
    // Predicated region
    $region2: #{tpu_custom_call.1} parent=1 // pred_check
      _
    $region3: #{tpu_custom_call.1} parent=1 // pred_check_branch
      %11 = sbr.rel (0) target = $region5
    $region4: #{tpu_custom_call.1} parent=1 // pred_region
      %s13 = ssub.s32 1024, 1024
      %14 = vsyncadd [#allocation3], %s13
      %s15 = sshll.u32 [#allocation2], 4
      %s16 = int_to_ptr.vmem [resolvable:$true] %s15
      %21 = dma.hbm_to_vmem [thread:$0]  %s0, 1024, %s16, [#allocation3], 128, 128, 8
    $region5: #{tpu_custom_call.1} parent=1 // pred_fallthru
      _
    // Predicated region
    $region6: #{tpu_custom_call.1} parent=1 // pred_check
      _
    $region7: #{tpu_custom_call.1} parent=1 // pred_check_branch
      %23 = sbr.rel (0) target = $region9
    $region8: #{tpu_custom_call.1} parent=1 // pred_region
      %s25 = ssub.s32 1024, 1024
      %26 = vsyncadd [#allocation6], %s25
      %s27 = sshll.u32 [#allocation5], 4
      %s28 = int_to_ptr.vmem [resolvable:$true] %s27
      %33 = dma.hbm_to_vmem [thread:$0]  %s1, 1024, %s28, [#allocation6], 128, 128, 8
    $region9: #{tpu_custom_call.1} parent=1 // pred_fallthru
      _
    // Predicated region
    $region10: #{tpu_custom_call.1} parent=1 // pred_check
      _
    $region11: #{tpu_custom_call.1} parent=1 // pred_check_branch
      %35 = sbr.rel (0) target = $region13
    $region12: #{tpu_custom_call.1} parent=1 // pred_region
      %36 = dma.done [#allocation3], 1024
    $region13: #{tpu_custom_call.1} parent=1 // pred_fallthru
      _
    // Predicated region
    $region14: #{tpu_custom_call.1} parent=1 // pred_check
      _
    $region15: #{tpu_custom_call.1} parent=1 // pred_check_branch
      %38 = sbr.rel (0) target = $region17
    $region16: #{tpu_custom_call.1} parent=1 // pred_region
      %39 = dma.done [#allocation6], 1024
    $region17: #{tpu_custom_call.1} parent=1 // pred_fallthru
      _
    %v40 = vld [vmem:[#allocation2] sm:$0xff]
    %v41 = vld [vmem:[#allocation2 + $0x8] sm:$0xff]
    %v42 = vld [vmem:[#allocation2 + $0x10] sm:$0xff]
    %v43 = vld [vmem:[#allocation2 + $0x18] sm:$0xff]
    %v44 = vld [vmem:[#allocation2 + $0x20] sm:$0xff]
    %v45 = vld [vmem:[#allocation2 + $0x28] sm:$0xff]
    %v46 = vld [vmem:[#allocation2 + $0x30] sm:$0xff]
    %v47 = vld [vmem:[#allocation2 + $0x38] sm:$0xff]
    %v48 = vld [vmem:[#allocation5] sm:$0xff]
    %v49 = vld [vmem:[#allocation5 + $0x8] sm:$0xff]
    %v50 = vld [vmem:[#allocation5 + $0x10] sm:$0xff]
    %v51 = vld [vmem:[#allocation5 + $0x18] sm:$0xff]
    %v52 = vld [vmem:[#allocation5 + $0x20] sm:$0xff]
    %v53 = vld [vmem:[#allocation5 + $0x28] sm:$0xff]
    %v54 = vld [vmem:[#allocation5 + $0x30] sm:$0xff]
    %v55 = vld [vmem:[#allocation5 + $0x38] sm:$0xff]
    %v56 = vsub.f32 %v40, %v48
    %v57 = vsub.f32 %v41, %v49
    %v58 = vsub.f32 %v42, %v50
    %v59 = vsub.f32 %v43, %v51
    %v60 = vsub.f32 %v44, %v52
    %v61 = vsub.f32 %v45, %v53
    %v62 = vsub.f32 %v46, %v54
    %v63 = vsub.f32 %v47, %v55
    %v64 = vlaneseq
    %v65 = vand.u32 %v64, 127
    %v66 = vlaneseq
    %v67 = vshrl.u32 %v66, 7
    %v68 = vadd.s32 %v67, 8
    %vm69 = vcmp.lt.s32.totalorder %v65, 15
    %vm70 = vcmask 1047680
    %71 = vrot.lane.b32.xlu0 %v56, 16
    %v72 = vpop.permute.xlu0 %71
    %v73 = vsel %vm70, %v72, %v56
    %74 = vrot.lane.b32.xlu0 %v57, 16
    %v75 = vpop.permute.xlu0 %74
    %v76 = vsel %vm70, %v75, %v57
    %77 = vrot.lane.b32.xlu0 %v58, 16
    %v78 = vpop.permute.xlu0 %77
    %v79 = vsel %vm70, %v78, %v58
    %80 = vrot.lane.b32.xlu0 %v59, 16
    %v81 = vpop.permute.xlu0 %80
    %v82 = vsel %vm70, %v81, %v59
    %83 = vrot.lane.b32.xlu0 %v60, 16
    %v84 = vpop.permute.xlu0 %83
    %v85 = vsel %vm70, %v84, %v60
    %86 = vrot.lane.b32.xlu0 %v61, 16
    %v87 = vpop.permute.xlu0 %86
    %v88 = vsel %vm70, %v87, %v61
    %89 = vrot.lane.b32.xlu0 %v62, 16
    %v90 = vpop.permute.xlu0 %89
    %v91 = vsel %vm70, %v90, %v62
    %92 = vrot.lane.b32.xlu0 %v63, 16
    %v93 = vpop.permute.xlu0 %92
    %v94 = vsel %vm70, %v93, %v63
    %95 = vrot.lane.b32.xlu0 %v73, 16
    %v96 = vpop.permute.xlu0 %95
    %97 = vrot.lane.b32.xlu0 %v76, 16
    %v98 = vpop.permute.xlu0 %97
    %99 = vrot.lane.b32.xlu0 %v79, 16
    %v100 = vpop.permute.xlu0 %99
    %101 = vrot.lane.b32.xlu0 %v82, 16
    %v102 = vpop.permute.xlu0 %101
    %103 = vrot.lane.b32.xlu0 %v85, 16
    %v104 = vpop.permute.xlu0 %103
    %105 = vrot.lane.b32.xlu0 %v88, 16
    %v106 = vpop.permute.xlu0 %105
    %107 = vrot.lane.b32.xlu0 %v91, 16
    %v108 = vpop.permute.xlu0 %107
    %109 = vrot.lane.b32.xlu0 %v94, 16
    %v110 = vpop.permute.xlu0 %109
    %v111 = vsel %vm70, %v96, %v56
    %v112 = vsel %vm70, %v98, %v57
    %v113 = vsel %vm70, %v100, %v58
    %v114 = vsel %vm70, %v102, %v59
    %v115 = vsel %vm70, %v104, %v60
    %v116 = vsel %vm70, %v106, %v61
    %v117 = vsel %vm70, %v108, %v62
    %v118 = vsel %vm70, %v110, %v63
    %v119 = vsel %vm69, 1, 0
    %vm120 = vcmp.eq.s32.totalorder %v119, 1
    %129 = vrot.lane.b32.xlu0 %v111, 127
    %v130 = vpop.permute.xlu0 %129
    %131 = vrot.lane.b32.xlu0 %v112, 127
    %v132 = vpop.permute.xlu0 %131
    %133 = vrot.lane.b32.xlu0 %v113, 127
    %v134 = vpop.permute.xlu0 %133
    %135 = vrot.lane.b32.xlu0 %v114, 127
    %v136 = vpop.permute.xlu0 %135
    %137 = vrot.lane.b32.xlu0 %v115, 127
    %v138 = vpop.permute.xlu0 %137
    %139 = vrot.lane.b32.xlu0 %v116, 127
    %v140 = vpop.permute.xlu0 %139
    %141 = vrot.lane.b32.xlu0 %v117, 127
    %v142 = vpop.permute.xlu0 %141
    %143 = vrot.lane.b32.xlu0 %v118, 127
    %v144 = vpop.permute.xlu0 %143
    %v153 = vsel %vm120, %v130, 0.0
    %v154 = vsel %vm120, %v132, 0.0
    %v155 = vsel %vm120, %v134, 0.0
    %v156 = vsel %vm120, %v136, 0.0
    %v157 = vsel %vm120, %v138, 0.0
    %v158 = vsel %vm120, %v140, 0.0
    %v159 = vsel %vm120, %v142, 0.0
    %v160 = vsel %vm120, %v144, 0.0
    %vm161 = vcmp.gt.s32.totalorder %v65, 0
    %v162 = vsel %vm161, 1, 0
    %vm163 = vcmp.eq.s32.totalorder %v162, 1
    %164 = vrot.lane.b32.xlu0 %v111, 113
    %v165 = vpop.permute.xlu0 %164
    %166 = vrot.lane.b32.xlu0 %v112, 113
    %v167 = vpop.permute.xlu0 %166
    %168 = vrot.lane.b32.xlu0 %v113, 113
    %v169 = vpop.permute.xlu0 %168
    %170 = vrot.lane.b32.xlu0 %v114, 113
    %v171 = vpop.permute.xlu0 %170
    %172 = vrot.lane.b32.xlu0 %v115, 113
    %v173 = vpop.permute.xlu0 %172
    %174 = vrot.lane.b32.xlu0 %v116, 113
    %v175 = vpop.permute.xlu0 %174
    %176 = vrot.lane.b32.xlu0 %v117, 113
    %v177 = vpop.permute.xlu0 %176
    %178 = vrot.lane.b32.xlu0 %v118, 113
    %v179 = vpop.permute.xlu0 %178
    %v188 = vsel %vm163, %v165, 0.0
    %v189 = vsel %vm163, %v167, 0.0
    %v190 = vsel %vm163, %v169, 0.0
    %v191 = vsel %vm163, %v171, 0.0
    %v192 = vsel %vm163, %v173, 0.0
    %v193 = vsel %vm163, %v175, 0.0
    %v194 = vsel %vm163, %v177, 0.0
    %v195 = vsel %vm163, %v179, 0.0
    %vm196 = vcmp.lt.s32.totalorder %v67, 15
    %vm197 = vcmp.lt.s32.totalorder %v68, 15
    %v198 = vrot.slane %v56, 1
    %v199 = vrot.slane %v58, 1
    %v200 = vrot.slane %v60, 1
    %v201 = vrot.slane %v62, 1
    %v202 = vrot.slane %v57, 1
    %v203 = vrot.slane %v59, 1
    %v204 = vrot.slane %v61, 1
    %v205 = vrot.slane %v63, 1
    %vm206 = vcmp.lt.s32.totalorder %v67, 7
    %v207 = vsel %vm206, %v198, %v202
    %v208 = vsel %vm206, %v199, %v203
    %v209 = vsel %vm206, %v200, %v204
    %v210 = vsel %vm206, %v201, %v205
    %v211 = vsel %vm206, %v202, %v198
    %v212 = vsel %vm206, %v203, %v199
    %v213 = vsel %vm206, %v204, %v200
    %v214 = vsel %vm206, %v205, %v201
    %v215 = vsel %vm196, 1, 0
    %v216 = vsel %vm197, 1, 0
    %vm217 = vcmp.eq.s32.totalorder %v215, 1
    %vm218 = vcmp.eq.s32.totalorder %v216, 1
    %v219 = vsel %vm217, %v207, 0.0
    %v220 = vsel %vm218, %v211, 0.0
    %v221 = vsel %vm217, %v208, 0.0
    %v222 = vsel %vm218, %v212, 0.0
    %v223 = vsel %vm217, %v209, 0.0
    %v224 = vsel %vm218, %v213, 0.0
    %v225 = vsel %vm217, %v210, 0.0
    %v226 = vsel %vm218, %v214, 0.0
    %vm227 = vcmp.gt.s32.totalorder %v67, 0
    %vm228 = vcmp.gt.s32.totalorder %v68, 0
    %v229 = vrot.slane %v56, 7
    %v230 = vrot.slane %v58, 7
    %v231 = vrot.slane %v60, 7
    %v232 = vrot.slane %v62, 7
    %v233 = vrot.slane %v57, 7
    %v234 = vrot.slane %v59, 7
    %v235 = vrot.slane %v61, 7
    %v236 = vrot.slane %v63, 7
    %vm237 = vcmp.lt.s32.totalorder %v67, 1
    %v238 = vsel %vm237, %v229, %v233
    %v239 = vsel %vm237, %v230, %v234
    %v240 = vsel %vm237, %v231, %v235
    %v241 = vsel %vm237, %v232, %v236
    %v242 = vsel %vm237, %v233, %v229
    %v243 = vsel %vm237, %v234, %v230
    %v244 = vsel %vm237, %v235, %v231
    %v245 = vsel %vm237, %v236, %v232
    %v246 = vsel %vm227, 1, 0
    %v247 = vsel %vm228, 1, 0
    %vm248 = vcmp.eq.s32.totalorder %v246, 1
    %vm249 = vcmp.eq.s32.totalorder %v247, 1
    %v250 = vsel %vm248, %v242, 0.0
    %v251 = vsel %vm249, %v238, 0.0
    %v252 = vsel %vm248, %v243, 0.0
    %v253 = vsel %vm249, %v239, 0.0
    %v254 = vsel %vm248, %v244, 0.0
    %v255 = vsel %vm249, %v240, 0.0
    %v256 = vsel %vm248, %v245, 0.0
    %v257 = vsel %vm249, %v241, 0.0
    %v258 = vsub.f32 %v153, %v188
    %v259 = vsub.f32 %v154, %v189
    %v260 = vsub.f32 %v155, %v190
    %v261 = vsub.f32 %v156, %v191
    %v262 = vsub.f32 %v157, %v192
    %v263 = vsub.f32 %v158, %v193
    %v264 = vsub.f32 %v159, %v194
    %v265 = vsub.f32 %v160, %v195
    %v266 = vand.u32 2147483647, %v258
    %v267 = vand.u32 2147483647, %v259
    %v268 = vand.u32 2147483647, %v260
    %v269 = vand.u32 2147483647, %v261
    %v270 = vand.u32 2147483647, %v262
    %v271 = vand.u32 2147483647, %v263
    %v272 = vand.u32 2147483647, %v264
    %v273 = vand.u32 2147483647, %v265
    %v274 = vsub.f32 %v219, %v250
    %v275 = vsub.f32 %v220, %v251
    %v276 = vsub.f32 %v221, %v252
    %v277 = vsub.f32 %v222, %v253
    %v278 = vsub.f32 %v223, %v254
    %v279 = vsub.f32 %v224, %v255
    %v280 = vsub.f32 %v225, %v256
    %v281 = vsub.f32 %v226, %v257
    %v282 = vand.u32 2147483647, %v274
    %v283 = vand.u32 2147483647, %v275
    %v284 = vand.u32 2147483647, %v276
    %v285 = vand.u32 2147483647, %v277
    %v286 = vand.u32 2147483647, %v278
    %v287 = vand.u32 2147483647, %v279
    %v288 = vand.u32 2147483647, %v280
    %v289 = vand.u32 2147483647, %v281
    %v290 = vadd.f32 %v266, %v282
    %v291 = vadd.f32 %v267, %v283
    %v292 = vadd.f32 %v268, %v284
    %v293 = vadd.f32 %v269, %v285
    %v294 = vadd.f32 %v270, %v286
    %v295 = vadd.f32 %v271, %v287
    %v296 = vadd.f32 %v272, %v288
    %v297 = vadd.f32 %v273, %v289
    %v298 = vmul.f32 %v290, 0.5
    %v299 = vmul.f32 %v291, 0.5
    %v300 = vmul.f32 %v292, 0.5
    %v301 = vmul.f32 %v293, 0.5
    %v302 = vmul.f32 %v294, 0.5
    %v303 = vmul.f32 %v295, 0.5
    %v304 = vmul.f32 %v296, 0.5
    %v305 = vmul.f32 %v297, 0.5
    %vm306 = vcmask 130048
    %v307 = vsel %vm306, %v298, 0.0
    %v308 = vsel %vm306, %v300, 0.0
    %v309 = vadd.f32 %v307, %v308
    %v310 = vsel %vm306, %v302, 0.0
    %v311 = vadd.f32 %v309, %v310
    %v312 = vsel %vm306, %v304, 0.0
    %v313 = vadd.f32 %v311, %v312
    %v314 = vsel %vm306, %v299, 0.0
    %v315 = vsel %vm306, %v301, 0.0
    %v316 = vadd.f32 %v314, %v315
    %v317 = vsel %vm306, %v303, 0.0
    %v318 = vadd.f32 %v316, %v317
    %v319 = vsel %vm306, %v305, 0.0
    %v320 = vadd.f32 %v318, %v319
    %v321 = vsel %vm306, %v313, 0.0
    %v322 = vsel %vm306, %v320, 0.0
    %v323 = vadd.f32 %v321, %v322
    %v324 = vrot.slane %v323, 4
    %v325 = vadd.f32 %v323, %v324
    %v326 = vrot.slane %v325, 2
    %v327 = vadd.f32 %v325, %v326
    %v328 = vrot.slane %v327, 1
    %v329 = vadd.f32 %v327, %v328
    %vm330 = vcmask 122880
    %331 = vst.msk [vmem:[#allocation7] sm:$0x1] %vm330, %v329
    // Predicated region
    $region18: #{tpu_custom_call.1} parent=1 // pred_check
      _
    $region19: #{tpu_custom_call.1} parent=1 // pred_check_branch
      %333 = sbr.rel (0) target = $region21
    $region20: #{tpu_custom_call.1} parent=1 // pred_region
      %s335 = ssub.s32 16, 16
      %336 = vsyncadd [#allocation4], %s335
      %s338 = sshll.u32 [#allocation7], 4
      %s339 = int_to_ptr.vmem [resolvable:$true] %s338
      %341 = dma.vmem_to_hbm [thread:$0]  %s339, 16, %s2, [#allocation4]
    $region21: #{tpu_custom_call.1} parent=1 // pred_fallthru
      _
    // Predicated region
    $region22: #{tpu_custom_call.1} parent=1 // pred_check
      _
    $region23: #{tpu_custom_call.1} parent=1 // pred_check_branch
      %343 = sbr.rel (0) target = $region25
    $region24: #{tpu_custom_call.1} parent=1 // pred_region
      %344 = dma.done [#allocation4], 16
    $region25: #{tpu_custom_call.1} parent=1 // pred_fallthru
      _
    %345 = vsyncpa [#allocation3], 1
    %346 = vsyncpa [#allocation6], 1
    %347 = vsyncpa [#allocation4], 1

</llo_original>
